<compile_context>
chip_gen: v7x
topology: tpu7x:2x2x1
jax: 0.10.0
libtpu: 0.0.40
codegen_flags: <defaults>
</compile_context>

<pallas_src>
import math

import jax
import jax.numpy as jnp
from jax.experimental import pallas as pl
from jax.experimental.pallas import tpu as pltpu

_LANE = 512                     # wide lane-dense last dim (multiple of 128)
_BLOCK_TARGET_BYTES = 2 << 20   # ~2 MiB block; x4 (double-buffered in+out) = 8 MiB VMEM
_VMEM_LIMIT_BYTES = 32 << 20    # explicit scoped-VMEM limit, safe on v5e/v6e/v7x


def _identity_kernel(x_ref, o_ref):
    # Pure pass-through: BaseMethod.forward defines no computation.
    o_ref[...] = x_ref[...]


def _round_up(a, b):
    return ((a + b - 1) // b) * b


def _identity_copy_2d(flat, rows, lane, block_rows):
    """Streaming identity copy over a (rows, lane) lane-dense slab."""
    grid = (rows // block_rows,)  # block_rows divides rows exactly
    x2d = flat.reshape(rows, lane)
    return pl.pallas_call(
        _identity_kernel,
        out_shape=jax.ShapeDtypeStruct((rows, lane), flat.dtype),
        grid_spec=pltpu.PrefetchScalarGridSpec(
            num_scalar_prefetch=0,
            grid=grid,
            in_specs=[pl.BlockSpec((block_rows, lane), lambda i: (i, 0))],
            out_specs=pl.BlockSpec((block_rows, lane), lambda i: (i, 0)),
        ),
        # Identity: alias input buffer to output so no extra HBM allocation /
        # writeback is needed under jit.
        input_output_aliases={0: 0},
        compiler_params=pltpu.CompilerParams(
            dimension_semantics=("parallel",),   # lets v7x shard grid across 2 TCs
            vmem_limit_bytes=_VMEM_LIMIT_BYTES,
        ),
    )(x2d)


@jax.jit
def base_method_forward(x):
    """Identity pass-through of a tensor via a large-tile Pallas TPU copy."""
    orig_shape = x.shape
    total = math.prod(orig_shape)
    itemsize = jnp.dtype(x.dtype).itemsize
    # dtype-aware sublane multiple: f32 -> 8, bf16 -> 16, int8/fp8 -> 32
    sublane = {4: 8, 2: 16, 1: 32}.get(itemsize, 8)

    raw_rows = -(-total // _LANE)  # cdiv(total, LANE)
    # Block rows: ~2 MiB worth, rounded to the dtype sublane multiple,
    # but never larger than the (sublane-rounded) data itself.
    cap_rows = max(
        sublane,
        (_BLOCK_TARGET_BYTES // (_LANE * itemsize)) // sublane * sublane,
    )
    block_rows = max(sublane, min(cap_rows, _round_up(raw_rows, sublane)))
    rows = _round_up(raw_rows, block_rows)   # block_rows divides rows exactly
    padded_total = rows * _LANE

    flat = x.reshape(-1)
    if padded_total != total:
        flat = jnp.pad(flat, (0, padded_total - total))

    out2d = _identity_copy_2d(flat, rows, _LANE, block_rows)

    out_flat = out2d.reshape(-1)
    if padded_total != total:
        out_flat = out_flat[:total]
    return out_flat.reshape(orig_shape)


class BaseMethodPallas:
    """JAX/Pallas analogue of BaseMethod: stores collaborators; forward is a
    pass-through (the PyTorch forward is abstract / `pass`)."""

    def __init__(self, args=None, net=None, optimizer=None, scheduler=None):
        self.args = args
        self.optimizer = optimizer
        self.scheduler = scheduler
        self.net = net

    def forward(self, x):
        # TODO(synk): PyTorch forward is abstract (`pass`, returns None); the
        # faithful op is a no-op.  We route the tensor through the identity
        # kernel so the TPU data path is exercised.
        return base_method_forward(x)

    def training_epoch(self, density, one_epoch_embeds, task_wise_mean,
                       task_wise_cov, task_wise_train_data_nums, t):
        # TODO(synk): host-side training-loop stub — no device compute.
        pass


if __name__ == "__main__":
    key = jax.random.PRNGKey(0)
    # Small NCHW input consistent with a vision training-method wrapper.
    x = jax.random.normal(key, (2, 4, 16, 16), dtype=jnp.float32)

    method = BaseMethodPallas(args=None, net=None, optimizer=None, scheduler=None)
    y = method.forward(x)
    y = jax.block_until_ready(y)

    assert y.shape == x.shape and y.dtype == x.dtype
    assert bool(jnp.allclose(y, x))
    print("KERNEL_OK")
</pallas_src>

<mosaic_0001>
module attributes {stable_mosaic.version = 11 : i64} {
  func.func @_identity_kernel(%arg0: i32, %arg1: memref<8x512xf32, #tpu.memory_space<vmem>>, %arg2: memref<8x512xf32, #tpu.memory_space<vmem>>) attributes {dimension_semantics = [#tpu.dimension_semantics<parallel>], iteration_bounds = array<i64: 1>, scalar_prefetch = 0 : i64, scratch_operands = 0 : i64, tpu.core_type = #tpu.core_type<tc>, window_params = [{transform_indices = @transform_0, window_bounds = array<i64: 8, 512>}, {transform_indices = @transform_1, window_bounds = array<i64: 8, 512>}]} {
    %c0 = arith.constant 0 : index
    %c0_0 = arith.constant 0 : index
    %0 = vector.load %arg1[%c0, %c0_0] : memref<8x512xf32, #tpu.memory_space<vmem>>, vector<8x512xf32>
    %c0_1 = arith.constant 0 : index
    %c0_2 = arith.constant 0 : index
    %1 = vector.load %arg2[%c0_1, %c0_2] : memref<8x512xf32, #tpu.memory_space<vmem>>, vector<8x512xf32>
    tpu.vector_store %arg2[%c0_1, %c0_2], %0 {strides = array<i32>} : memref<8x512xf32, #tpu.memory_space<vmem>>, vector<8x512xf32>,
    return
  }
  func.func @transform_0(%arg0: i32) -> (i32, i32) {
    %c0_i32 = arith.constant 0 : i32
    %c0_i32_0 = arith.constant 0 : i32
    return %arg0, %c0_i32 : i32, i32
  }
  func.func @transform_1(%arg0: i32) -> (i32, i32) {
    %c0_i32 = arith.constant 0 : i32
    %c0_i32_0 = arith.constant 0 : i32
    return %arg0, %c0_i32 : i32, i32
  }
}

</mosaic_0001>

<llo_original>
// kernel: base_method_forward.1
$region0: #{base_method_forward.1}
  #allocation0 [shape = 'u32[]', space=smem, size = 0x4, offset = 0x4, fixed_abs, tag = 'smem constant byte address 0x4 - core index']
  #allocation1 [shape = 'u32[144,128]{1,0:T(1,128)}', space=vmem, size = 0x12000, scoped, tag = 'internal scratch']
  %s0 = inlined_call_operand.vmem [shape: f32[8,512], index: 0, kind: input, shape index: {}, may-alias: {0,1}]
  %s1 = inlined_call_operand.vmem [shape: f32[8,512], index: 1, kind: output, shape index: {}, may-alias: {0,1}]
  %s2 = sld [smem:[#allocation0]]
  $region14: #{base_method_forward.1} parent=0
    _
  %s4 = ssub.s32 1, %s2
  %s5 = scalar_select 0, %s4, %s2
  // Predicated region
  $region2: #{base_method_forward.1} parent=0 // pred_check
    _
  $region3: #{base_method_forward.1} parent=0 // pred_check_branch
    %7 = sbr.rel (0) target = $region5
  $region4: #{base_method_forward.1} parent=0 // pred_region
    _
  $region5: #{base_method_forward.1} parent=0 // pred_fallthru
    _
  %v8 = vld [vmem:[%s0] sm:$0xff]
  %v9 = vld [vmem:[%s0 + $0x8] sm:$0xff]
  %v10 = vld [vmem:[%s0 + $0x10] sm:$0xff]
  %v11 = vld [vmem:[%s0 + $0x18] sm:$0xff]
  %12 = vst [vmem:[%s1] sm:$0xff] %v8
  %13 = vst [vmem:[%s1 + $0x8] sm:$0xff] %v9
  %14 = vst [vmem:[%s1 + $0x10] sm:$0xff] %v10
  %15 = vst [vmem:[%s1 + $0x18] sm:$0xff] %v11
  // Predicated region
  $region6: #{base_method_forward.1} parent=0 // pred_check
    _
  $region7: #{base_method_forward.1} parent=0 // pred_check_branch
    %17 = sbr.rel (0) target = $region9
  $region8: #{base_method_forward.1} parent=0 // pred_region
    _
  $region9: #{base_method_forward.1} parent=0 // pred_fallthru
    _
  // Predicated region
  $region10: #{base_method_forward.1} parent=0 // pred_check
    _
  $region11: #{base_method_forward.1} parent=0 // pred_check_branch
    %19 = sbr.rel (0) target = $region13
  $region12: #{base_method_forward.1} parent=0 // pred_region
    _
  $region13: #{base_method_forward.1} parent=0 // pred_fallthru
    _

</llo_original>
